<compile_context>
chip_gen: v7x
topology: tpu7x:2x2x1
jax: 0.10.0
libtpu: 0.0.40
codegen_flags: <defaults>
</compile_context>

<pallas_src>
import math
from functools import partial

import jax
import jax.numpy as jnp
from jax.experimental import pallas as pl
from jax.experimental.pallas import tpu as pltpu


def transformer_kernel(h_ref, e_ref, wqkv_ref, wpeeg_ref,
                       w0_ref, w1_ref, w2_ref, pk_ref, out_ref,
                       *, G, N, in_dim, out_dim, e_dim):
    GN = G * N
    # (G, N, dim) slabs flattened to (G*N, dim): every linear is one MXU pass.
    h = h_ref[...].reshape(GN, in_dim)
    e = e_ref[...].reshape(GN, e_dim)

    # ---- packed small parameters (single aligned DMA), sliced by row ----
    b_qkv  = pk_ref[0:1, :3 * out_dim]
    b_peeg = pk_ref[1:2, :2 * e_dim]
    b0     = pk_ref[2:3, :out_dim]
    b1     = pk_ref[3:4, :2 * out_dim]
    b2     = pk_ref[4:5, :out_dim]
    scale  = pk_ref[5:6, :out_dim]   # gamma * rsqrt(rvar + eps), host-precomputed
    shift  = pk_ref[6:7, :out_dim]   # beta - rmean * scale,      host-precomputed

    # ---- Att: fused Q/K/V projection over the whole (G*N)-row slab ----
    qkv = jnp.dot(h, wqkv_ref[...], preferred_element_type=jnp.float32) + b_qkv
    q = qkv[:, :out_dim].reshape(G, N, out_dim)
    k = qkv[:, out_dim:2 * out_dim].reshape(G, N, out_dim)
    v = qkv[:, 2 * out_dim:].reshape(G, N, out_dim)

    # ---- fused proj_e / e_gate projection ----
    peeg = jnp.dot(e, wpeeg_ref[...], preferred_element_type=jnp.float32) + b_peeg
    proj_e = peeg[:, :e_dim].reshape(G, N, e_dim)
    e_gate = jax.nn.sigmoid(peeg[:, e_dim:]).reshape(G, N, e_dim)

    # ---- attention(): batched over the G graphs in this block ----
    inv_dk = jnp.float32(1.0 / math.sqrt(out_dim))      # dim = k.shape[-1]
    scores = jnp.einsum('gqd,gkd->gqk', q, k,
                        preferred_element_type=jnp.float32) * inv_dk
    ue = scores + proj_e
    # softmax(dim=-1) with the denominator folded out of the NxN path
    m = jnp.max(ue, axis=-1, keepdims=True)
    p = jnp.exp(ue - m)
    row_sum = jnp.sum(p, axis=-1, keepdims=True)
    num = jnp.einsum('gqk,gkd->gqd', e_gate * p, v,
                     preferred_element_type=jnp.float32)
    # exact reciprocal (approx=True would loosen the 1e-4 tolerance)
    h_attn = (num * pl.reciprocal(row_sum, approx=False)).reshape(GN, out_dim)
    # TODO(synk): F.dropout(attm, 0.2) and the head dropouts default to
    # training=True in PyTorch; implemented as identity (inference) here.

    # ---- Transformer head (BatchNorm1d eval folded to scale/shift) ----
    h0 = jnp.dot(h_attn, w0_ref[...], preferred_element_type=jnp.float32) + b0
    hbn = (h_attn + h0) * scale + shift
    h1 = jnp.maximum(
        jnp.dot(hbn, w1_ref[...], preferred_element_type=jnp.float32) + b1, 0.0)
    h2 = jnp.dot(h1, w2_ref[...], preferred_element_type=jnp.float32) + b2
    out_ref[...] = ((hbn + h2) * scale + shift).reshape(G, N, out_dim)


def transformer_forward(h, e, params, *, target_rows=256):
    """Batched Pallas call: G graphs per grid block, weights resident across steps."""
    B, N, in_dim = h.shape
    e_dim = e.shape[-1]
    out_dim = params["wq"].shape[1]

    # Graphs per block: aim for ~256 MXU LHS rows per linear; whole batch if small.
    G = int(min(B, max(1, pl.cdiv(target_rows, N))))
    num_blocks = int(pl.cdiv(B, G))
    B_pad = num_blocks * G
    if B_pad != B:
        h = jnp.pad(h, ((0, B_pad - B), (0, 0), (0, 0)))
        e = jnp.pad(e, ((0, B_pad - B), (0, 0), (0, 0)))

    # ---- fuse / pack parameters (host side, once) ----
    w_qkv = jnp.concatenate([params["wq"], params["wk"], params["wv"]], axis=1)
    w_peeg = jnp.concatenate([params["wpe"], params["weg"]], axis=1)

    # BatchNorm1d (eval, running stats) folded to scale/shift on the host.
    bn_scale = params["gamma"] * jax.lax.rsqrt(params["rvar"] + 1e-5)
    bn_shift = params["beta"] - params["rmean"] * bn_scale

    pack_w = 128 * int(pl.cdiv(max(3 * out_dim, 2 * e_dim, 2 * out_dim), 128))

    def _row(x):
        x = x.reshape(1, -1)
        return jnp.pad(x, ((0, 0), (0, pack_w - x.shape[1])))

    pk = jnp.concatenate([
        _row(jnp.concatenate([params["bq"], params["bk"], params["bv"]], axis=1)),
        _row(jnp.concatenate([params["bpe"], params["beg"]], axis=1)),
        _row(params["b0"]), _row(params["b1"]), _row(params["b2"]),
        _row(bn_scale), _row(bn_shift),
    ], axis=0)
    pk = jnp.pad(pk, ((0, 8 - pk.shape[0]), (0, 0)))      # (8, pack_w) aligned slab

    # Resident (grid-invariant) 2-D parameters.  pl.Buffered(1) single-buffering
    # would halve their VMEM footprint on v7x; omitted since they total <64 KiB
    # and the demo grid has a single step (nothing to double-buffer anyway).
    def resident(arr):
        return pl.BlockSpec(arr.shape, lambda b: (0, 0))

    def per_block(last_dim):
        return pl.BlockSpec((G, N, last_dim), lambda b: (b, 0, 0))

    gn = G * N
    flops_block = 2 * gn * (3 * in_dim * out_dim
                            + 2 * e_dim * e_dim
                            + 2 * N * out_dim
                            + 5 * out_dim * out_dim)
    cost = pl.CostEstimate(
        flops=num_blocks * flops_block,
        transcendentals=num_blocks * (G * N * N + gn * e_dim),
        bytes_accessed=4 * (h.size + e.size + B_pad * N * out_dim
                            + w_qkv.size + w_peeg.size + params["w0"].size
                            + params["w1"].size + params["w2"].size + pk.size))

    kernel = partial(transformer_kernel, G=G, N=N, in_dim=in_dim,
                     out_dim=out_dim, e_dim=e_dim)
    out = pl.pallas_call(
        kernel,
        out_shape=jax.ShapeDtypeStruct((B_pad, N, out_dim), jnp.float32),
        grid=(num_blocks,),
        in_specs=[
            per_block(in_dim),            # h   (pipelined per block)
            per_block(e_dim),             # e   (pipelined per block)
            resident(w_qkv),              # fused QKV weight
            resident(w_peeg),             # fused proj_e / e_gate weight
            resident(params["w0"]),
            resident(params["w1"]),
            resident(params["w2"]),
            resident(pk),                 # packed biases / folded BN params
        ],
        out_specs=per_block(out_dim),
        compiler_params=pltpu.CompilerParams(dimension_semantics=("parallel",)),
        cost_estimate=cost,
    )(h, e, w_qkv, w_peeg, params["w0"], params["w1"], params["w2"], pk)
    return out[:B]


def reference_forward(h, e, p):
    """Pure-JAX per-graph reference (same inference semantics)."""
    q = h @ p["wq"] + p["bq"]
    k = h @ p["wk"] + p["bk"]
    v = h @ p["wv"] + p["bv"]
    e_gate = jax.nn.sigmoid(e @ p["weg"] + p["beg"])
    proj_e = e @ p["wpe"] + p["bpe"]
    scores = (q @ k.T) / jnp.sqrt(jnp.float32(k.shape[1]))
    attm = jax.nn.softmax(scores + proj_e, axis=-1)
    h_attn = (e_gate * attm) @ v
    h0 = h_attn @ p["w0"] + p["b0"]
    bn = lambda x: (x - p["rmean"]) * jax.lax.rsqrt(p["rvar"] + 1e-5) * p["gamma"] + p["beta"]
    hbn = bn(h_attn + h0)
    h1 = jnp.maximum(hbn @ p["w1"] + p["b1"], 0.0)
    h2 = h1 @ p["w2"] + p["b2"]
    return bn(hbn + h2)


def init_params(key, in_dim, out_dim, e_dim):
    ks = jax.random.split(key, 16)

    def lin(k, fan_in, fan_out):
        bound = 1.0 / math.sqrt(fan_in)
        kw, kb = jax.random.split(k)
        w = jax.random.uniform(kw, (fan_in, fan_out), jnp.float32, -bound, bound)
        b = jax.random.uniform(kb, (1, fan_out), jnp.float32, -bound, bound)
        return w, b

    p = {}
    p["wq"], p["bq"] = lin(ks[0], in_dim, out_dim)
    p["wk"], p["bk"] = lin(ks[1], in_dim, out_dim)
    p["wv"], p["bv"] = lin(ks[2], in_dim, out_dim)
    p["wpe"], p["bpe"] = lin(ks[3], e_dim, e_dim)
    p["weg"], p["beg"] = lin(ks[4], e_dim, e_dim)
    p["w0"], p["b0"] = lin(ks[5], out_dim, out_dim)
    p["w1"], p["b1"] = lin(ks[6], out_dim, out_dim * 2)
    p["w2"], p["b2"] = lin(ks[7], out_dim * 2, out_dim)
    # BatchNorm1d affine + running stats (deterministic, non-trivial values)
    p["gamma"] = 1.0 + 0.05 * jax.random.normal(ks[8], (1, out_dim), jnp.float32)
    p["beta"] = 0.05 * jax.random.normal(ks[9], (1, out_dim), jnp.float32)
    p["rmean"] = 0.05 * jax.random.normal(ks[10], (1, out_dim), jnp.float32)
    p["rvar"] = 1.0 + 0.1 * jax.random.uniform(ks[11], (1, out_dim), jnp.float32)
    return p


if __name__ == "__main__":
    B = 2          # graphs; whole batch fits in one grid block at these shapes
    N = 8          # nodes per graph / sequence length (e_dim must equal N)
    IN_DIM = 32
    OUT_DIM = 32
    E_DIM = N

    key = jax.random.PRNGKey(0)
    k_h, k_e, k_p = jax.random.split(key, 3)
    h = jax.random.normal(k_h, (B, N, IN_DIM), jnp.float32)
    e = jax.random.normal(k_e, (B, N, E_DIM), jnp.float32)
    params = init_params(k_p, IN_DIM, OUT_DIM, E_DIM)

    out = transformer_forward(h, e, params)
    out = jax.block_until_ready(out)
    assert out.shape == (B, N, OUT_DIM)

    ref = jnp.stack([reference_forward(h[b], e[b], params) for b in range(B)])
    assert jnp.allclose(out, ref, rtol=1e-4, atol=1e-4), "mismatch vs JAX reference"

    print("KERNEL_OK")
</pallas_src>

<mosaic_0001>
module attributes {stable_mosaic.version = 11 : i64} {
  func.func @transformer_kernel(%arg0: i32, %arg1: memref<2x8x32xf32, #tpu.memory_space<vmem>>, %arg2: memref<2x8x8xf32, #tpu.memory_space<vmem>>, %arg3: memref<32x96xf32, #tpu.memory_space<vmem>>, %arg4: memref<8x16xf32, #tpu.memory_space<vmem>>, %arg5: memref<32x32xf32, #tpu.memory_space<vmem>>, %arg6: memref<32x64xf32, #tpu.memory_space<vmem>>, %arg7: memref<64x32xf32, #tpu.memory_space<vmem>>, %arg8: memref<8x128xf32, #tpu.memory_space<vmem>>, %arg9: memref<2x8x32xf32, #tpu.memory_space<vmem>>) attributes {dimension_semantics = [#tpu.dimension_semantics<parallel>], iteration_bounds = array<i64: 1>, scalar_prefetch = 0 : i64, scratch_operands = 0 : i64, tpu.core_type = #tpu.core_type<tc>, window_params = [{transform_indices = @transform_0, window_bounds = array<i64: 2, 8, 32>}, {transform_indices = @transform_1, window_bounds = array<i64: 2, 8, 8>}, {pipeline_mode = #tpu.pipeline_mode<synchronous>, transform_indices = @transform_2, window_bounds = array<i64: 32, 96>}, {pipeline_mode = #tpu.pipeline_mode<synchronous>, transform_indices = @transform_3, window_bounds = array<i64: 8, 16>}, {pipeline_mode = #tpu.pipeline_mode<synchronous>, transform_indices = @transform_4, window_bounds = array<i64: 32, 32>}, {pipeline_mode = #tpu.pipeline_mode<synchronous>, transform_indices = @transform_5, window_bounds = array<i64: 32, 64>}, {pipeline_mode = #tpu.pipeline_mode<synchronous>, transform_indices = @transform_6, window_bounds = array<i64: 64, 32>}, {pipeline_mode = #tpu.pipeline_mode<synchronous>, transform_indices = @transform_7, window_bounds = array<i64: 8, 128>}, {transform_indices = @transform_8, window_bounds = array<i64: 2, 8, 32>}]} {
    %c0 = arith.constant 0 : index
    %c0_0 = arith.constant 0 : index
    %c0_1 = arith.constant 0 : index
    %0 = vector.load %arg1[%c0, %c0_0, %c0_1] : memref<2x8x32xf32, #tpu.memory_space<vmem>>, vector<2x8x32xf32>
    %1 = vector.shape_cast %0 : vector<2x8x32xf32> to vector<16x32xf32>
    %c0_2 = arith.constant 0 : index
    %c0_3 = arith.constant 0 : index
    %c0_4 = arith.constant 0 : index
    %2 = vector.load %arg2[%c0_2, %c0_3, %c0_4] : memref<2x8x8xf32, #tpu.memory_space<vmem>>, vector<2x8x8xf32>
    %3 = vector.shape_cast %2 : vector<2x8x8xf32> to vector<16x8xf32>
    %c0_5 = arith.constant 0 : index
    %c0_6 = arith.constant 0 : index
    %4 = vector.load %arg8[%c0_5, %c0_6] : memref<8x128xf32, #tpu.memory_space<vmem>>, vector<1x96xf32>
    %c1 = arith.constant 1 : index
    %c0_7 = arith.constant 0 : index
    %5 = vector.load %arg8[%c1, %c0_7] : memref<8x128xf32, #tpu.memory_space<vmem>>, vector<1x16xf32>
    %c2 = arith.constant 2 : index
    %c0_8 = arith.constant 0 : index
    %6 = vector.load %arg8[%c2, %c0_8] : memref<8x128xf32, #tpu.memory_space<vmem>>, vector<1x32xf32>
    %c3 = arith.constant 3 : index
    %c0_9 = arith.constant 0 : index
    %7 = vector.load %arg8[%c3, %c0_9] : memref<8x128xf32, #tpu.memory_space<vmem>>, vector<1x64xf32>
    %c4 = arith.constant 4 : index
    %c0_10 = arith.constant 0 : index
    %8 = vector.load %arg8[%c4, %c0_10] : memref<8x128xf32, #tpu.memory_space<vmem>>, vector<1x32xf32>
    %c5 = arith.constant 5 : index
    %c0_11 = arith.constant 0 : index
    %9 = vector.load %arg8[%c5, %c0_11] : memref<8x128xf32, #tpu.memory_space<vmem>>, vector<1x32xf32>
    %c6 = arith.constant 6 : index
    %c0_12 = arith.constant 0 : index
    %10 = vector.load %arg8[%c6, %c0_12] : memref<8x128xf32, #tpu.memory_space<vmem>>, vector<1x32xf32>
    %c0_13 = arith.constant 0 : index
    %c0_14 = arith.constant 0 : index
    %11 = vector.load %arg3[%c0_13, %c0_14] : memref<32x96xf32, #tpu.memory_space<vmem>>, vector<32x96xf32>
    %cst = arith.constant dense<0.000000e+00> : vector<16x96xf32>
    %12 = tpu.matmul %1, %11, %cst {dimension_numbers = #tpu.dot_dimension_numbers<[1], [0], [0], [1], [0, 0, 1, 1], [], []>} : vector<16x32xf32>, vector<32x96xf32>, vector<16x96xf32> -> vector<16x96xf32>
    %13 = vector.broadcast %4 : vector<1x96xf32> to vector<16x96xf32>
    %14 = arith.addf %12, %13 : vector<16x96xf32>
    %15 = vector.extract_strided_slice %14 {offsets = [0, 0], sizes = [16, 32], strides = [1, 1]} : vector<16x96xf32> to vector<16x32xf32>
    %16 = vector.shape_cast %15 : vector<16x32xf32> to vector<2x8x32xf32>
    %17 = vector.extract_strided_slice %14 {offsets = [0, 32], sizes = [16, 32], strides = [1, 1]} : vector<16x96xf32> to vector<16x32xf32>
    %18 = vector.shape_cast %17 : vector<16x32xf32> to vector<2x8x32xf32>
    %19 = vector.extract_strided_slice %14 {offsets = [0, 64], sizes = [16, 32], strides = [1, 1]} : vector<16x96xf32> to vector<16x32xf32>
    %20 = vector.shape_cast %19 : vector<16x32xf32> to vector<2x8x32xf32>
    %c0_15 = arith.constant 0 : index
    %c0_16 = arith.constant 0 : index
    %21 = vector.load %arg4[%c0_15, %c0_16] : memref<8x16xf32, #tpu.memory_space<vmem>>, vector<8x16xf32>
    %cst_17 = arith.constant dense<0.000000e+00> : vector<16x16xf32>
    %22 = tpu.matmul %3, %21, %cst_17 {dimension_numbers = #tpu.dot_dimension_numbers<[1], [0], [0], [1], [0, 0, 1, 1], [], []>} : vector<16x8xf32>, vector<8x16xf32>, vector<16x16xf32> -> vector<16x16xf32>
    %23 = vector.broadcast %5 : vector<1x16xf32> to vector<16x16xf32>
    %24 = arith.addf %22, %23 : vector<16x16xf32>
    %25 = vector.extract_strided_slice %24 {offsets = [0, 0], sizes = [16, 8], strides = [1, 1]} : vector<16x16xf32> to vector<16x8xf32>
    %26 = vector.shape_cast %25 : vector<16x8xf32> to vector<2x8x8xf32>
    %27 = vector.extract_strided_slice %24 {offsets = [0, 8], sizes = [16, 8], strides = [1, 1]} : vector<16x16xf32> to vector<16x8xf32>
    %28 = arith.negf %27 : vector<16x8xf32>
    %29 = math.exp %28 : vector<16x8xf32>
    %cst_18 = arith.constant 1.000000e+00 : f32
    %30 = vector.broadcast %cst_18 : f32 to vector<16x8xf32>
    %31 = arith.addf %30, %29 : vector<16x8xf32>
    %32 = arith.divf %30, %31 : vector<16x8xf32>
    %33 = vector.shape_cast %32 : vector<16x8xf32> to vector<2x8x8xf32>
    "tpu.trace_start"() <{level = 10 : i32, message = "gqd,gkd->gqk"}> : () -> ()
    %cst_19 = arith.constant dense<0.000000e+00> : vector<2x8x8xf32>
    %34 = tpu.matmul %16, %18, %cst_19 {dimension_numbers = #tpu.dot_dimension_numbers<[2], [2], [1], [1], [0, 0, 0, 1, 1, 1], [0], [0]>} : vector<2x8x32xf32>, vector<2x8x32xf32>, vector<2x8x8xf32> -> vector<2x8x8xf32>
    "tpu.trace_stop"() : () -> ()
    %cst_20 = arith.constant 0.176776692 : f32
    %35 = vector.broadcast %cst_20 : f32 to vector<2x8x8xf32>
    %36 = arith.mulf %34, %35 : vector<2x8x8xf32>
    %37 = arith.addf %36, %26 : vector<2x8x8xf32>
    %cst_21 = arith.constant dense<0xFF800000> : vector<2x8xf32>
    %38 = vector.multi_reduction <maximumf>, %37, %cst_21 [2] : vector<2x8x8xf32> to vector<2x8xf32>
    %39 = vector.shape_cast %38 : vector<2x8xf32> to vector<2x8x1xf32>
    %40 = vector.broadcast %39 : vector<2x8x1xf32> to vector<2x8x8xf32>
    %41 = arith.subf %37, %40 : vector<2x8x8xf32>
    %42 = math.exp %41 : vector<2x8x8xf32>
    %cst_22 = arith.constant dense<0.000000e+00> : vector<2x8xf32>
    %43 = vector.multi_reduction <add>, %42, %cst_22 [2] : vector<2x8x8xf32> to vector<2x8xf32>
    %44 = vector.shape_cast %43 : vector<2x8xf32> to vector<2x8x1xf32>
    %45 = arith.mulf %33, %42 : vector<2x8x8xf32>
    "tpu.trace_start"() <{level = 10 : i32, message = "gqk,gkd->gqd"}> : () -> ()
    %cst_23 = arith.constant dense<0.000000e+00> : vector<2x8x32xf32>
    %46 = tpu.matmul %45, %20, %cst_23 {dimension_numbers = #tpu.dot_dimension_numbers<[2], [1], [1], [2], [0, 0, 0, 1, 1, 2], [0], [0]>} : vector<2x8x8xf32>, vector<2x8x32xf32>, vector<2x8x32xf32> -> vector<2x8x32xf32>
    "tpu.trace_stop"() : () -> ()
    %47 = tpu.reciprocal %44 : vector<2x8x1xf32> -> vector<2x8x1xf32>
    %48 = vector.broadcast %47 : vector<2x8x1xf32> to vector<2x8x32xf32>
    %49 = arith.mulf %46, %48 : vector<2x8x32xf32>
    %50 = vector.shape_cast %49 : vector<2x8x32xf32> to vector<16x32xf32>
    %c0_24 = arith.constant 0 : index
    %c0_25 = arith.constant 0 : index
    %51 = vector.load %arg5[%c0_24, %c0_25] : memref<32x32xf32, #tpu.memory_space<vmem>>, vector<32x32xf32>
    %cst_26 = arith.constant dense<0.000000e+00> : vector<16x32xf32>
    %52 = tpu.matmul %50, %51, %cst_26 {dimension_numbers = #tpu.dot_dimension_numbers<[1], [0], [0], [1], [0, 0, 1, 1], [], []>} : vector<16x32xf32>, vector<32x32xf32>, vector<16x32xf32> -> vector<16x32xf32>
    %53 = vector.broadcast %6 : vector<1x32xf32> to vector<16x32xf32>
    %54 = arith.addf %52, %53 : vector<16x32xf32>
    %55 = arith.addf %50, %54 : vector<16x32xf32>
    %56 = vector.broadcast %9 : vector<1x32xf32> to vector<16x32xf32>
    %57 = arith.mulf %55, %56 : vector<16x32xf32>
    %58 = vector.broadcast %10 : vector<1x32xf32> to vector<16x32xf32>
    %59 = arith.addf %57, %58 : vector<16x32xf32>
    %c0_27 = arith.constant 0 : index
    %c0_28 = arith.constant 0 : index
    %60 = vector.load %arg6[%c0_27, %c0_28] : memref<32x64xf32, #tpu.memory_space<vmem>>, vector<32x64xf32>
    %cst_29 = arith.constant dense<0.000000e+00> : vector<16x64xf32>
    %61 = tpu.matmul %59, %60, %cst_29 {dimension_numbers = #tpu.dot_dimension_numbers<[1], [0], [0], [1], [0, 0, 1, 1], [], []>} : vector<16x32xf32>, vector<32x64xf32>, vector<16x64xf32> -> vector<16x64xf32>
    %62 = vector.broadcast %7 : vector<1x64xf32> to vector<16x64xf32>
    %63 = arith.addf %61, %62 : vector<16x64xf32>
    %cst_30 = arith.constant 0.000000e+00 : f32
    %64 = vector.broadcast %cst_30 : f32 to vector<16x64xf32>
    %65 = arith.maximumf %63, %64 : vector<16x64xf32>
    %c0_31 = arith.constant 0 : index
    %c0_32 = arith.constant 0 : index
    %66 = vector.load %arg7[%c0_31, %c0_32] : memref<64x32xf32, #tpu.memory_space<vmem>>, vector<64x32xf32>
    %cst_33 = arith.constant dense<0.000000e+00> : vector<16x32xf32>
    %67 = tpu.matmul %65, %66, %cst_33 {dimension_numbers = #tpu.dot_dimension_numbers<[1], [0], [0], [1], [0, 0, 1, 1], [], []>} : vector<16x64xf32>, vector<64x32xf32>, vector<16x32xf32> -> vector<16x32xf32>
    %68 = vector.broadcast %8 : vector<1x32xf32> to vector<16x32xf32>
    %69 = arith.addf %67, %68 : vector<16x32xf32>
    %70 = arith.addf %59, %69 : vector<16x32xf32>
    %71 = vector.broadcast %9 : vector<1x32xf32> to vector<16x32xf32>
    %72 = arith.mulf %70, %71 : vector<16x32xf32>
    %73 = vector.broadcast %10 : vector<1x32xf32> to vector<16x32xf32>
    %74 = arith.addf %72, %73 : vector<16x32xf32>
    %75 = vector.shape_cast %74 : vector<16x32xf32> to vector<2x8x32xf32>
    %c0_34 = arith.constant 0 : index
    %c0_35 = arith.constant 0 : index
    %c0_36 = arith.constant 0 : index
    %76 = vector.load %arg9[%c0_34, %c0_35, %c0_36] : memref<2x8x32xf32, #tpu.memory_space<vmem>>, vector<2x8x32xf32>
    tpu.vector_store %arg9[%c0_34, %c0_35, %c0_36], %75 {strides = array<i32>} : memref<2x8x32xf32, #tpu.memory_space<vmem>>, vector<2x8x32xf32>,
    return
  }
  func.func @transform_0(%arg0: i32) -> (i32, i32, i32) {
    %c0_i32 = arith.constant 0 : i32
    %c0_i32_0 = arith.constant 0 : i32
    %c0_i32_1 = arith.constant 0 : i32
    return %arg0, %c0_i32, %c0_i32_0 : i32, i32, i32
  }
  func.func @transform_1(%arg0: i32) -> (i32, i32, i32) {
    %c0_i32 = arith.constant 0 : i32
    %c0_i32_0 = arith.constant 0 : i32
    %c0_i32_1 = arith.constant 0 : i32
    return %arg0, %c0_i32, %c0_i32_0 : i32, i32, i32
  }
  func.func @transform_2(%arg0: i32) -> (i32, i32) {
    %c0_i32 = arith.constant 0 : i32
    %c0_i32_0 = arith.constant 0 : i32
    %c0_i32_1 = arith.constant 0 : i32
    return %c0_i32, %c0_i32_0 : i32, i32
  }
  func.func @transform_3(%arg0: i32) -> (i32, i32) {
    %c0_i32 = arith.constant 0 : i32
    %c0_i32_0 = arith.constant 0 : i32
    %c0_i32_1 = arith.constant 0 : i32
    return %c0_i32, %c0_i32_0 : i32, i32
  }
  func.func @transform_4(%arg0: i32) -> (i32, i32) {
    %c0_i32 = arith.constant 0 : i32
    %c0_i32_0 = arith.constant 0 : i32
    %c0_i32_1 = arith.constant 0 : i32
    return %c0_i32, %c0_i32_0 : i32, i32
  }
  func.func @transform_5(%arg0: i32) -> (i32, i32) {
    %c0_i32 = arith.constant 0 : i32
    %c0_i32_0 = arith.constant 0 : i32
    %c0_i32_1 = arith.constant 0 : i32
    return %c0_i32, %c0_i32_0 : i32, i32
  }
  func.func @transform_6(%arg0: i32) -> (i32, i32) {
    %c0_i32 = arith.constant 0 : i32
    %c0_i32_0 = arith.constant 0 : i32
    %c0_i32_1 = arith.constant 0 : i32
    return %c0_i32, %c0_i32_0 : i32, i32
  }
  func.func @transform_7(%arg0: i32) -> (i32, i32) {
    %c0_i32 = arith.constant 0 : i32
    %c0_i32_0 = arith.constant 0 : i32
    %c0_i32_1 = arith.constant 0 : i32
    return %c0_i32, %c0_i32_0 : i32, i32
  }
  func.func @transform_8(%arg0: i32) -> (i32, i32, i32) {
    %c0_i32 = arith.constant 0 : i32
    %c0_i32_0 = arith.constant 0 : i32
    %c0_i32_1 = arith.constant 0 : i32
    return %arg0, %c0_i32, %c0_i32_0 : i32, i32, i32
  }
}

</mosaic_0001>

<llo_original>
// kernel: tpu_custom_call.1
$region0: #{tpu_custom_call.1}
  #allocation0 [shape = 'u32[]', space=smem, size = 0x4, offset = 0x4, fixed_abs, tag = 'smem constant byte address 0x4 - core index']
  #allocation1 [shape = 'u32[144,128]{1,0:T(1,128)}', space=vmem, size = 0x12000, scoped, tag = 'internal scratch']
  %s0 = inlined_call_operand.hbm [shape: f32[2,8,32], index: 0, kind: input, shape index: {}]
  %s1 = inlined_call_operand.hbm [shape: f32[2,8,8], index: 1, kind: input, shape index: {}]
  %s2 = inlined_call_operand.vmem [shape: f32[32,96], index: 2, kind: input, shape index: {}]
  %s3 = inlined_call_operand.vmem [shape: f32[8,16], index: 3, kind: input, shape index: {}]
  %s4 = inlined_call_operand.vmem [shape: f32[32,32], index: 4, kind: input, shape index: {}]
  %s5 = inlined_call_operand.vmem [shape: f32[32,64], index: 5, kind: input, shape index: {}]
  %s6 = inlined_call_operand.vmem [shape: f32[64,32], index: 6, kind: input, shape index: {}]
  %s7 = inlined_call_operand.vmem [shape: f32[8,128], index: 7, kind: input, shape index: {}]
  %s8 = inlined_call_operand.hbm [shape: f32[2,8,32], index: 8, kind: output, shape index: {}]
  %s9 = sld [smem:[#allocation0]]
  $region50: #{tpu_custom_call.1} parent=0
    _
  %s11 = ssub.s32 1, %s9
  %s12 = scalar_select 0, %s11, %s9
  $region1: #{tpu_custom_call.1} parent=0
    #allocation2 [shape = 'u8[8192]{0}', space=vmem, size = 0x2000, scoped, tag = 'input window, operand 0, single buffered']
    #allocation3 [shape = 's32[1]{0}', space=sflag, size = 0x4, scoped, tag = 'scoped memory for tpu_custom_call.1']
    #allocation4 [shape = 's32[1]{0}', space=sflag, size = 0x4, scoped, tag = 'scoped memory for tpu_custom_call.1']
    #allocation5 [shape = 'u8[8192]{0}', space=vmem, size = 0x2000, scoped, tag = 'input window, operand 1, single buffered']
    #allocation6 [shape = 's32[1]{0}', space=sflag, size = 0x4, scoped, tag = 'scoped memory for tpu_custom_call.1']
    #allocation7 [shape = 'u8[8192]{0}', space=vmem, size = 0x2000, scoped, tag = 'output window, operand 0, single buffered']
    %13 = vsyncpa [#allocation3], 0
    %14 = vsyncpa [#allocation6], 0
    %15 = vsyncpa [#allocation4], 0
    // Predicated region
    $region2: #{tpu_custom_call.1} parent=1 // pred_check
      _
    $region3: #{tpu_custom_call.1} parent=1 // pred_check_branch
      %17 = sbr.rel (0) target = $region5
    $region4: #{tpu_custom_call.1} parent=1 // pred_region
      %s19 = ssub.s32 256, 256
      %20 = vsyncadd [#allocation3], %s19
      %s21 = sshll.u32 [#allocation2], 4
      %s22 = int_to_ptr.vmem [resolvable:$true] %s21
      %27 = dma.hbm_to_vmem [thread:$0]  %s0, 256, %s22, [#allocation3], 128, 128, 8
    $region5: #{tpu_custom_call.1} parent=1 // pred_fallthru
      _
    // Predicated region
    $region6: #{tpu_custom_call.1} parent=1 // pred_check
      _
    $region7: #{tpu_custom_call.1} parent=1 // pred_check_branch
      %29 = sbr.rel (0) target = $region9
    $region8: #{tpu_custom_call.1} parent=1 // pred_region
      %s31 = ssub.s32 256, 256
      %32 = vsyncadd [#allocation6], %s31
      %s33 = sshll.u32 [#allocation5], 4
      %s34 = int_to_ptr.vmem [resolvable:$true] %s33
      %39 = dma.hbm_to_vmem [thread:$0]  %s1, 256, %s34, [#allocation6], 128, 128, 8
    $region9: #{tpu_custom_call.1} parent=1 // pred_fallthru
      _
    // Predicated region
    $region10: #{tpu_custom_call.1} parent=1 // pred_check
      _
    $region11: #{tpu_custom_call.1} parent=1 // pred_check_branch
      %41 = sbr.rel (0) target = $region13
    $region12: #{tpu_custom_call.1} parent=1 // pred_region
      _
    $region13: #{tpu_custom_call.1} parent=1 // pred_fallthru
      _
    // Predicated region
    $region14: #{tpu_custom_call.1} parent=1 // pred_check
      _
    $region15: #{tpu_custom_call.1} parent=1 // pred_check_branch
      %43 = sbr.rel (0) target = $region17
    $region16: #{tpu_custom_call.1} parent=1 // pred_region
      _
    $region17: #{tpu_custom_call.1} parent=1 // pred_fallthru
      _
    // Predicated region
    $region18: #{tpu_custom_call.1} parent=1 // pred_check
      _
    $region19: #{tpu_custom_call.1} parent=1 // pred_check_branch
      %45 = sbr.rel (0) target = $region21
    $region20: #{tpu_custom_call.1} parent=1 // pred_region
      _
    $region21: #{tpu_custom_call.1} parent=1 // pred_fallthru
      _
    // Predicated region
    $region22: #{tpu_custom_call.1} parent=1 // pred_check
      _
    $region23: #{tpu_custom_call.1} parent=1 // pred_check_branch
      %47 = sbr.rel (0) target = $region25
    $region24: #{tpu_custom_call.1} parent=1 // pred_region
      _
    $region25: #{tpu_custom_call.1} parent=1 // pred_fallthru
      _
    // Predicated region
    $region26: #{tpu_custom_call.1} parent=1 // pred_check
      _
    $region27: #{tpu_custom_call.1} parent=1 // pred_check_branch
      %49 = sbr.rel (0) target = $region29
    $region28: #{tpu_custom_call.1} parent=1 // pred_region
      _
    $region29: #{tpu_custom_call.1} parent=1 // pred_fallthru
      _
    // Predicated region
    $region30: #{tpu_custom_call.1} parent=1 // pred_check
      _
    $region31: #{tpu_custom_call.1} parent=1 // pred_check_branch
      %51 = sbr.rel (0) target = $region33
    $region32: #{tpu_custom_call.1} parent=1 // pred_region
      _
    $region33: #{tpu_custom_call.1} parent=1 // pred_fallthru
      _
    // Predicated region
    $region34: #{tpu_custom_call.1} parent=1 // pred_check
      _
    $region35: #{tpu_custom_call.1} parent=1 // pred_check_branch
      %53 = sbr.rel (0) target = $region37
    $region36: #{tpu_custom_call.1} parent=1 // pred_region
      %54 = dma.done [#allocation3], 256
    $region37: #{tpu_custom_call.1} parent=1 // pred_fallthru
      _
    // Predicated region
    $region38: #{tpu_custom_call.1} parent=1 // pred_check
      _
    $region39: #{tpu_custom_call.1} parent=1 // pred_check_branch
      %56 = sbr.rel (0) target = $region41
    $region40: #{tpu_custom_call.1} parent=1 // pred_region
      %57 = dma.done [#allocation6], 256
    $region41: #{tpu_custom_call.1} parent=1 // pred_fallthru
      _
    %v58 = vld [vmem:[#allocation2] sm:$0xff]
    %v59 = vld [vmem:[#allocation2 + $0x8] sm:$0xff]
    %v60 = vld [vmem:[#allocation5] sm:$0xff]
    %v61 = vld [vmem:[#allocation5 + $0x8] sm:$0xff]
    %v62 = vld [vmem:[%s7] sm:$0x1]
    %v63 = vld [vmem:[%s7 + $0x1] sm:$0x1]
    %v64 = vld [vmem:[%s7 + $0x2] sm:$0x1]
    %v65 = vld [vmem:[%s7 + $0x3] sm:$0x1]
    %v66 = vld [vmem:[%s7 + $0x4] sm:$0x1]
    %v67 = vld [vmem:[%s7 + $0x5] sm:$0x1]
    %v68 = vld [vmem:[%s7 + $0x6] sm:$0x1]
    %v69 = vld [vmem:[%s2] sm:$0xff]
    %v70 = vld [vmem:[%s2 + $0x8] sm:$0xff]
    %v71 = vld [vmem:[%s2 + $0x10] sm:$0xff]
    %v72 = vld [vmem:[%s2 + $0x18] sm:$0xff]
    %v73 = vlaneseq
    %v74 = vshrl.u32 %v73, 7
    %v75 = vsub.s32 0, %v74
    %v76 = vrot.slane %v62, %v75
    %vm77 = vcmask 261120
    %v79 = vsel %vm77, %v58, 0
    %v82 = vsel %vm77, %v59, 0
    %84 = vmatprep.subr.mxu0 0.0
    %85 = vmatpush1.msra.mxu0 %v69
    %86 = vmatprep.subr.mxu0 0.0
    %87 = vmatpush1.msra.mxu0 %v70
    %88 = vmatprep.subr.mxu0 0.0
    %89 = vmatpush1.msra.mxu0 %v71
    %90 = vmatprep.subr.mxu0 0.0
    %91 = vmatpush1.msra.mxu0 %v72
    %92 = vmatprep.subr.mxu0 0.0
    %93 = vmatpush1.msra.mxu0 0.0
    %94 = vmatprep.subr.mxu0 0.0
    %95 = vmatpush1.msra.mxu0 0.0
    %96 = vmatprep.subr.mxu0 0.0
    %97 = vmatpush1.msra.mxu0 0.0
    %98 = vmatprep.subr.mxu0 0.0
    %99 = vmatpush1.msra.mxu0 0.0
    %100 = vmatprep.subr.mxu0 0.0
    %101 = vmatpush1.msra.mxu0 0.0
    %102 = vmatprep.subr.mxu0 0.0
    %103 = vmatpush1.msra.mxu0 0.0
    %104 = vmatprep.subr.mxu0 0.0
    %105 = vmatpush1.msra.mxu0 0.0
    %106 = vmatprep.subr.mxu0 0.0
    %107 = vmatpush1.msra.mxu0 0.0
    %108 = vmatprep.subr.mxu0 0.0
    %109 = vmatpush1.msra.mxu0 0.0
    %110 = vmatprep.subr.mxu0 0.0
    %111 = vmatpush1.msra.mxu0 0.0
    %112 = vmatprep.subr.mxu0 0.0
    %113 = vmatpush1.msra.mxu0 0.0
    %114 = vmatprep.subr.mxu0 0.0
    %115 = vmatpush1.msra.mxu0 0.0
    %116 = vmatprep.subr.mxu0 0.0
    %117 = vmatpush1.msra.mxu0 0.0
    %118 = vmatprep.subr.mxu0 0.0
    %119 = vmatpush1.msra.mxu0 0.0
    %120 = vmatprep.subr.mxu0 0.0
    %121 = vmatpush1.msra.mxu0 0.0
    %122 = vmatprep.subr.mxu0 0.0
    %123 = vmatpush1.msra.mxu0 0.0
    %124 = vmatprep.subr.mxu0 0.0
    %125 = vmatpush1.msra.mxu0 0.0
    %126 = vmatprep.subr.mxu0 0.0
    %127 = vmatpush1.msra.mxu0 0.0
    %128 = vmatprep.subr.mxu0 0.0
    %129 = vmatpush1.msra.mxu0 0.0
    %130 = vmatprep.subr.mxu0 0.0
    %131 = vmatpush1.msra.mxu0 0.0
    %132 = vmatprep.subr.mxu0 0.0
    %133 = vmatpush1.msra.mxu0 0.0
    %134 = vmatprep.subr.mxu0 0.0
    %135 = vmatpush1.msra.mxu0 0.0
    %136 = vmatprep.subr.mxu0 0.0
    %137 = vmatpush1.msra.mxu0 0.0
    %138 = vmatprep.subr.mxu0 0.0
    %139 = vmatpush1.msra.mxu0 0.0
    %140 = vmatprep.subr.mxu0 0.0
    %141 = vmatpush1.msra.mxu0 0.0
    %142 = vmatprep.subr.mxu0 0.0
    %143 = vmatpush1.msra.mxu0 0.0
    %144 = vmatprep.subr.mxu0 0.0
    %145 = vmatpush1.msra.mxu0 0.0
    %146 = vmatprep.subr.mxu0 0.0
    %147 = vmatpush1.msra.mxu0 0.0
    %148 = vmatprep.mubr.f32.mxu0 0.0
    %149 = vmatmul.mubr.f32.gmra.mrb[0].mxu0 %v79
    %v150 = vpop.f32.mrb[0].mxu0
    %v151 = vadd.f32 %v76, %v150
    %v152 = vpop.f32.mrb[0].mxu0
    %153 = vmatprep.mubr.f32.mxu0 0.0
    %154 = vmatmul.mubr.f32.gmra.mrb[0].mxu0 %v82
    %v155 = vpop.f32.mrb[0].mxu0
    %v156 = vadd.f32 %v76, %v155
    %v157 = vpop.f32.mrb[0].mxu0
    %158 = vdwg.mxu0
    %v159 = vld [vmem:[%s3] sm:$0xff]
    %v160 = vlaneseq
    %v161 = vshrl.u32 %v160, 7
    %v162 = vsub.s32 0, %v161
    %v163 = vrot.slane %v63, %v162
    %vm164 = vcmask 64512
    %v166 = vsel %vm164, %v60, 0
    %v169 = vsel %vm164, %v61, 0
    %171 = vmatprep.subr.mxu0 0.0
    %172 = vmatpush1.msra.mxu0 %v159
    %173 = vmatprep.subr.mxu0 0.0
    %174 = vmatpush1.msra.mxu0 0.0
    %175 = vmatprep.subr.mxu0 0.0
    %176 = vmatpush1.msra.mxu0 0.0
    %177 = vmatprep.subr.mxu0 0.0
    %178 = vmatpush1.msra.mxu0 0.0
    %179 = vmatprep.subr.mxu0 0.0
    %180 = vmatpush1.msra.mxu0 0.0
    %181 = vmatprep.subr.mxu0 0.0
    %182 = vmatpush1.msra.mxu0 0.0
    %183 = vmatprep.subr.mxu0 0.0
    %184 = vmatpush1.msra.mxu0 0.0
    %185 = vmatprep.subr.mxu0 0.0
    %186 = vmatpush1.msra.mxu0 0.0
    %187 = vmatprep.subr.mxu0 0.0
    %188 = vmatpush1.msra.mxu0 0.0
    %189 = vmatprep.subr.mxu0 0.0
    %190 = vmatpush1.msra.mxu0 0.0
    %191 = vmatprep.subr.mxu0 0.0
    %192 = vmatpush1.msra.mxu0 0.0
    %193 = vmatprep.subr.mxu0 0.0
    %194 = vmatpush1.msra.mxu0 0.0
    %195 = vmatprep.subr.mxu0 0.0
    %196 = vmatpush1.msra.mxu0 0.0
    %197 = vmatprep.subr.mxu0 0.0
    %198 = vmatpush1.msra.mxu0 0.0
    %199 = vmatprep.subr.mxu0 0.0
    %200 = vmatpush1.msra.mxu0 0.0
    %201 = vmatprep.subr.mxu0 0.0
    %202 = vmatpush1.msra.mxu0 0.0
    %203 = vmatprep.subr.mxu0 0.0
    %204 = vmatpush1.msra.mxu0 0.0
    %205 = vmatprep.subr.mxu0 0.0
    %206 = vmatpush1.msra.mxu0 0.0
    %207 = vmatprep.subr.mxu0 0.0
    %208 = vmatpush1.msra.mxu0 0.0
    %209 = vmatprep.subr.mxu0 0.0
    %210 = vmatpush1.msra.mxu0 0.0
    %211 = vmatprep.subr.mxu0 0.0
    %212 = vmatpush1.msra.mxu0 0.0
    %213 = vmatprep.subr.mxu0 0.0
    %214 = vmatpush1.msra.mxu0 0.0
    %215 = vmatprep.subr.mxu0 0.0
    %216 = vmatpush1.msra.mxu0 0.0
    %217 = vmatprep.subr.mxu0 0.0
    %218 = vmatpush1.msra.mxu0 0.0
    %219 = vmatprep.subr.mxu0 0.0
    %220 = vmatpush1.msra.mxu0 0.0
    %221 = vmatprep.subr.mxu0 0.0
    %222 = vmatpush1.msra.mxu0 0.0
    %223 = vmatprep.subr.mxu0 0.0
    %224 = vmatpush1.msra.mxu0 0.0
    %225 = vmatprep.subr.mxu0 0.0
    %226 = vmatpush1.msra.mxu0 0.0
    %227 = vmatprep.subr.mxu0 0.0
    %228 = vmatpush1.msra.mxu0 0.0
    %229 = vmatprep.subr.mxu0 0.0
    %230 = vmatpush1.msra.mxu0 0.0
    %231 = vmatprep.subr.mxu0 0.0
    %232 = vmatpush1.msra.mxu0 0.0
    %233 = vmatprep.subr.mxu0 0.0
    %234 = vmatpush1.msra.mxu0 0.0
    %235 = vmatprep.mubr.f32.mxu0 0.0
    %236 = vmatmul.mubr.f32.gmra.mrb[0].mxu0 %v166
    %v237 = vpop.f32.mrb[0].mxu0
    %v238 = vadd.f32 %v163, %v237
    %v239 = vpop.f32.mrb[0].mxu0
    %240 = vmatprep.mubr.f32.mxu0 0.0
    %241 = vmatmul.mubr.f32.gmra.mrb[0].mxu0 %v169
    %v242 = vpop.f32.mrb[0].mxu0
    %v243 = vadd.f32 %v163, %v242
    %v244 = vpop.f32.mrb[0].mxu0
    %245 = vdwg.mxu0
    %v246 = vxor.u32 %v238, 2147483648
    %v247 = vxor.u32 %v243, 2147483648
    %v248 = vmul.f32 %v246, 1.442695
    %v249 = vpow.pop %v248
    %v250 = vmul.f32 %v247, 1.442695
    %v251 = vpow.pop %v250
    %v252 = vadd.f32 %v249, 1.0
    %v253 = vadd.f32 %v251, 1.0
    %v254 = vrcp.pop %v252
    %v255 = vmul.f32 1.0, %v254
    %v256 = vrcp.pop %v253
    %v257 = vmul.f32 1.0, %v256
    %259 = vrot.lane.b32.xlu0 %v151, 96
    %v260 = vpop.permute.xlu0 %259
    %v261 = vsel %vm77, %v151, 0
    %v263 = vsel %vm77, %v260, 0
    %265 = vmatprep.subr.mxu0 0.0
    %266 = vmatpush1.xpose.msra.mxu0 %v263
    %267 = vmatprep.subr.mxu0 0.0
    %268 = vmatpush1.xpose.msra.mxu0 0.0
    %269 = vmatprep.subr.mxu0 0.0
    %270 = vmatpush1.xpose.msra.mxu0 0.0
    %271 = vmatprep.subr.mxu0 0.0
    %272 = vmatpush1.xpose.msra.mxu0 0.0
    %273 = vmatprep.subr.mxu0 0.0
    %274 = vmatpush1.xpose.msra.mxu0 0.0
    %275 = vmatprep.subr.mxu0 0.0
    %276 = vmatpush1.xpose.msra.mxu0 0.0
    %277 = vmatprep.subr.mxu0 0.0
    %278 = vmatpush1.xpose.msra.mxu0 0.0
    %279 = vmatprep.subr.mxu0 0.0
    %280 = vmatpush1.xpose.msra.mxu0 0.0
    %281 = vmatprep.subr.mxu0 0.0
    %282 = vmatpush1.xpose.msra.mxu0 0.0
    %283 = vmatprep.subr.mxu0 0.0
    %284 = vmatpush1.xpose.msra.mxu0 0.0
    %285 = vmatprep.subr.mxu0 0.0
    %286 = vmatpush1.xpose.msra.mxu0 0.0
    %287 = vmatprep.subr.mxu0 0.0
    %288 = vmatpush1.xpose.msra.mxu0 0.0
    %289 = vmatprep.subr.mxu0 0.0
    %290 = vmatpush1.xpose.msra.mxu0 0.0
    %291 = vmatprep.subr.mxu0 0.0
    %292 = vmatpush1.xpose.msra.mxu0 0.0
    %293 = vmatprep.subr.mxu0 0.0
    %294 = vmatpush1.xpose.msra.mxu0 0.0
    %295 = vmatprep.subr.mxu0 0.0
    %296 = vmatpush1.xpose.msra.mxu0 0.0
    %297 = vmatprep.subr.mxu0 0.0
    %298 = vmatpush1.xpose.msra.mxu0 0.0
    %299 = vmatprep.subr.mxu0 0.0
    %300 = vmatpush1.xpose.msra.mxu0 0.0
    %301 = vmatprep.subr.mxu0 0.0
    %302 = vmatpush1.xpose.msra.mxu0 0.0
    %303 = vmatprep.subr.mxu0 0.0
    %304 = vmatpush1.xpose.msra.mxu0 0.0
    %305 = vmatprep.subr.mxu0 0.0
    %306 = vmatpush1.xpose.msra.mxu0 0.0
    %307 = vmatprep.subr.mxu0 0.0
    %308 = vmatpush1.xpose.msra.mxu0 0.0
    %309 = vmatprep.subr.mxu0 0.0
    %310 = vmatpush1.xpose.msra.mxu0 0.0
    %311 = vmatprep.subr.mxu0 0.0
    %312 = vmatpush1.xpose.msra.mxu0 0.0
    %313 = vmatprep.subr.mxu0 0.0
    %314 = vmatpush1.xpose.msra.mxu0 0.0
    %315 = vmatprep.subr.mxu0 0.0
    %316 = vmatpush1.xpose.msra.mxu0 0.0
    %317 = vmatprep.subr.mxu0 0.0
    %318 = vmatpush1.xpose.msra.mxu0 0.0
    %319 = vmatprep.subr.mxu0 0.0
    %320 = vmatpush1.xpose.msra.mxu0 0.0
    %321 = vmatprep.subr.mxu0 0.0
    %322 = vmatpush1.xpose.msra.mxu0 0.0
    %323 = vmatprep.subr.mxu0 0.0
    %324 = vmatpush1.xpose.msra.mxu0 0.0
    %325 = vmatprep.subr.mxu0 0.0
    %326 = vmatpush1.xpose.msra.mxu0 0.0
    %327 = vmatprep.subr.mxu0 0.0
    %328 = vmatpush1.xpose.msra.mxu0 0.0
    %329 = vmatprep.mubr.f32.mxu0 0.0
    %330 = vmatmul.mubr.f32.gmra.mrb[0].mxu0 %v261
    %v331 = vpop.f32.mrb[0].mxu0
    %v332 = vadd.f32 0.0, %v331
    %v333 = vpop.f32.mrb[0].mxu0
    %334 = vdwg.mxu0
    %336 = vrot.lane.b32.xlu0 %v156, 96
    %v337 = vpop.permute.xlu0 %336
    %v338 = vsel %vm77, %v156, 0
    %v340 = vsel %vm77, %v337, 0
    %342 = vmatprep.subr.mxu0 0.0
    %343 = vmatpush1.xpose.msra.mxu0 %v340
    %344 = vmatprep.subr.mxu0 0.0
    %345 = vmatpush1.xpose.msra.mxu0 0.0
    %346 = vmatprep.subr.mxu0 0.0
    %347 = vmatpush1.xpose.msra.mxu0 0.0
    %348 = vmatprep.subr.mxu0 0.0
    %349 = vmatpush1.xpose.msra.mxu0 0.0
    %350 = vmatprep.subr.mxu0 0.0
    %351 = vmatpush1.xpose.msra.mxu0 0.0
    %352 = vmatprep.subr.mxu0 0.0
    %353 = vmatpush1.xpose.msra.mxu0 0.0
    %354 = vmatprep.subr.mxu0 0.0
    %355 = vmatpush1.xpose.msra.mxu0 0.0
    %356 = vmatprep.subr.mxu0 0.0
    %357 = vmatpush1.xpose.msra.mxu0 0.0
    %358 = vmatprep.subr.mxu0 0.0
    %359 = vmatpush1.xpose.msra.mxu0 0.0
    %360 = vmatprep.subr.mxu0 0.0
    %361 = vmatpush1.xpose.msra.mxu0 0.0
    %362 = vmatprep.subr.mxu0 0.0
    %363 = vmatpush1.xpose.msra.mxu0 0.0
    %364 = vmatprep.subr.mxu0 0.0
    %365 = vmatpush1.xpose.msra.mxu0 0.0
    %366 = vmatprep.subr.mxu0 0.0
    %367 = vmatpush1.xpose.msra.mxu0 0.0
    %368 = vmatprep.subr.mxu0 0.0
    %369 = vmatpush1.xpose.msra.mxu0 0.0
    %370 = vmatprep.subr.mxu0 0.0
    %371 = vmatpush1.xpose.msra.mxu0 0.0
    %372 = vmatprep.subr.mxu0 0.0
    %373 = vmatpush1.xpose.msra.mxu0 0.0
    %374 = vmatprep.subr.mxu0 0.0
    %375 = vmatpush1.xpose.msra.mxu0 0.0
    %376 = vmatprep.subr.mxu0 0.0
    %377 = vmatpush1.xpose.msra.mxu0 0.0
    %378 = vmatprep.subr.mxu0 0.0
    %379 = vmatpush1.xpose.msra.mxu0 0.0
    %380 = vmatprep.subr.mxu0 0.0
    %381 = vmatpush1.xpose.msra.mxu0 0.0
    %382 = vmatprep.subr.mxu0 0.0
    %383 = vmatpush1.xpose.msra.mxu0 0.0
    %384 = vmatprep.subr.mxu0 0.0
    %385 = vmatpush1.xpose.msra.mxu0 0.0
    %386 = vmatprep.subr.mxu0 0.0
    %387 = vmatpush1.xpose.msra.mxu0 0.0
    %388 = vmatprep.subr.mxu0 0.0
    %389 = vmatpush1.xpose.msra.mxu0 0.0
    %390 = vmatprep.subr.mxu0 0.0
    %391 = vmatpush1.xpose.msra.mxu0 0.0
    %392 = vmatprep.subr.mxu0 0.0
    %393 = vmatpush1.xpose.msra.mxu0 0.0
    %394 = vmatprep.subr.mxu0 0.0
    %395 = vmatpush1.xpose.msra.mxu0 0.0
    %396 = vmatprep.subr.mxu0 0.0
    %397 = vmatpush1.xpose.msra.mxu0 0.0
    %398 = vmatprep.subr.mxu0 0.0
    %399 = vmatpush1.xpose.msra.mxu0 0.0
    %400 = vmatprep.subr.mxu0 0.0
    %401 = vmatpush1.xpose.msra.mxu0 0.0
    %402 = vmatprep.subr.mxu0 0.0
    %403 = vmatpush1.xpose.msra.mxu0 0.0
    %404 = vmatprep.subr.mxu0 0.0
    %405 = vmatpush1.xpose.msra.mxu0 0.0
    %406 = vmatprep.mubr.f32.mxu0 0.0
    %407 = vmatmul.mubr.f32.gmra.mrb[0].mxu0 %v338
    %v408 = vpop.f32.mrb[0].mxu0
    %v409 = vadd.f32 0.0, %v408
    %v410 = vpop.f32.mrb[0].mxu0
    %411 = vdwg.mxu0
    %v412 = vmul.f32 %v332, 0.17677669
    %v413 = vmul.f32 %v409, 0.17677669
    %v414 = vadd.f32 %v412, %v238
    %v415 = vadd.f32 %v413, %v243
    %v416 = vsel %vm164, %v414, -inf
    %417 = vmax.xlane.f32.xlu0 %v416
    %v418 = vpop.xlane.xlu0 %417
    %v419 = vsel %vm164, %v415, -inf
    %420 = vmax.xlane.f32.xlu0 %v419
    %v421 = vpop.xlane.xlu0 %420
    %v422 = vsub.f32 %v414, %v418
    %v423 = vsub.f32 %v415, %v421
    %v424 = vmul.f32 %v422, 1.442695
    %v425 = vpow.pop %v424
    %v426 = vmul.f32 %v423, 1.442695
    %v427 = vpow.pop %v426
    %v428 = vsel %vm164, %v425, 0.0
    %429 = vadd.xlane.f32.xlu0 %v428
    %v430 = vpop.xlane.xlu0 %429
    %v431 = vsel %vm164, %v427, 0.0
    %432 = vadd.xlane.f32.xlu0 %v431
    %v433 = vpop.xlane.xlu0 %432
    %436 = vrot.lane.b32.xlu0 %v425, 8
    %v437 = vpop.permute.xlu0 %436
    %438 = vrot.lane.b32.xlu0 %v427, 8
    %v439 = vpop.permute.xlu0 %438
    %v442 = vmul.f32 %v255, %v437
    %v443 = vmul.f32 %v257, %v439
    %445 = vrot.lane.b32.xlu0 %v442, 120
    %v446 = vpop.permute.xlu0 %445
    %447 = vrot.lane.b32.xlu0 %v151, 64
    %v448 = vpop.permute.xlu0 %447
    %v450 = vsel %vm164, %v446, 0
    %452 = vmatprep.subr.mxu0 0.0
    %453 = vmatpush1.msra.mxu0 %v448
    %454 = vmatprep.subr.mxu0 0.0
    %455 = vmatpush1.msra.mxu0 0.0
    %456 = vmatprep.subr.mxu0 0.0
    %457 = vmatpush1.msra.mxu0 0.0
    %458 = vmatprep.subr.mxu0 0.0
    %459 = vmatpush1.msra.mxu0 0.0
    %460 = vmatprep.subr.mxu0 0.0
    %461 = vmatpush1.msra.mxu0 0.0
    %462 = vmatprep.subr.mxu0 0.0
    %463 = vmatpush1.msra.mxu0 0.0
    %464 = vmatprep.subr.mxu0 0.0
    %465 = vmatpush1.msra.mxu0 0.0
    %466 = vmatprep.subr.mxu0 0.0
    %467 = vmatpush1.msra.mxu0 0.0
    %468 = vmatprep.subr.mxu0 0.0
    %469 = vmatpush1.msra.mxu0 0.0
    %470 = vmatprep.subr.mxu0 0.0
    %471 = vmatpush1.msra.mxu0 0.0
    %472 = vmatprep.subr.mxu0 0.0
    %473 = vmatpush1.msra.mxu0 0.0
    %474 = vmatprep.subr.mxu0 0.0
    %475 = vmatpush1.msra.mxu0 0.0
    %476 = vmatprep.subr.mxu0 0.0
    %477 = vmatpush1.msra.mxu0 0.0
    %478 = vmatprep.subr.mxu0 0.0
    %479 = vmatpush1.msra.mxu0 0.0
    %480 = vmatprep.subr.mxu0 0.0
    %481 = vmatpush1.msra.mxu0 0.0
    %482 = vmatprep.subr.mxu0 0.0
    %483 = vmatpush1.msra.mxu0 0.0
    %484 = vmatprep.subr.mxu0 0.0
    %485 = vmatpush1.msra.mxu0 0.0
    %486 = vmatprep.subr.mxu0 0.0
    %487 = vmatpush1.msra.mxu0 0.0
    %488 = vmatprep.subr.mxu0 0.0
    %489 = vmatpush1.msra.mxu0 0.0
    %490 = vmatprep.subr.mxu0 0.0
    %491 = vmatpush1.msra.mxu0 0.0
    %492 = vmatprep.subr.mxu0 0.0
    %493 = vmatpush1.msra.mxu0 0.0
    %494 = vmatprep.subr.mxu0 0.0
    %495 = vmatpush1.msra.mxu0 0.0
    %496 = vmatprep.subr.mxu0 0.0
    %497 = vmatpush1.msra.mxu0 0.0
    %498 = vmatprep.subr.mxu0 0.0
    %499 = vmatpush1.msra.mxu0 0.0
    %500 = vmatprep.subr.mxu0 0.0
    %501 = vmatpush1.msra.mxu0 0.0
    %502 = vmatprep.subr.mxu0 0.0
    %503 = vmatpush1.msra.mxu0 0.0
    %504 = vmatprep.subr.mxu0 0.0
    %505 = vmatpush1.msra.mxu0 0.0
    %506 = vmatprep.subr.mxu0 0.0
    %507 = vmatpush1.msra.mxu0 0.0
    %508 = vmatprep.subr.mxu0 0.0
    %509 = vmatpush1.msra.mxu0 0.0
    %510 = vmatprep.subr.mxu0 0.0
    %511 = vmatpush1.msra.mxu0 0.0
    %512 = vmatprep.subr.mxu0 0.0
    %513 = vmatpush1.msra.mxu0 0.0
    %514 = vmatprep.subr.mxu0 0.0
    %515 = vmatpush1.msra.mxu0 0.0
    %516 = vmatprep.mubr.f32.mxu0 0.0
    %517 = vmatmul.mubr.f32.gmra.mrb[0].mxu0 %v450
    %v518 = vpop.f32.mrb[0].mxu0
    %v519 = vadd.f32 0.0, %v518
    %v520 = vpop.f32.mrb[0].mxu0
    %521 = vdwg.mxu0
    %523 = vrot.lane.b32.xlu0 %v443, 120
    %v524 = vpop.permute.xlu0 %523
    %525 = vrot.lane.b32.xlu0 %v156, 64
    %v526 = vpop.permute.xlu0 %525
    %v528 = vsel %vm164, %v524, 0
    %530 = vmatprep.subr.mxu0 0.0
    %531 = vmatpush1.msra.mxu0 %v526
    %532 = vmatprep.subr.mxu0 0.0
    %533 = vmatpush1.msra.mxu0 0.0
    %534 = vmatprep.subr.mxu0 0.0
    %535 = vmatpush1.msra.mxu0 0.0
    %536 = vmatprep.subr.mxu0 0.0
    %537 = vmatpush1.msra.mxu0 0.0
    %538 = vmatprep.subr.mxu0 0.0
    %539 = vmatpush1.msra.mxu0 0.0
    %540 = vmatprep.subr.mxu0 0.0
    %541 = vmatpush1.msra.mxu0 0.0
    %542 = vmatprep.subr.mxu0 0.0
    %543 = vmatpush1.msra.mxu0 0.0
    %544 = vmatprep.subr.mxu0 0.0
    %545 = vmatpush1.msra.mxu0 0.0
    %546 = vmatprep.subr.mxu0 0.0
    %547 = vmatpush1.msra.mxu0 0.0
    %548 = vmatprep.subr.mxu0 0.0
    %549 = vmatpush1.msra.mxu0 0.0
    %550 = vmatprep.subr.mxu0 0.0
    %551 = vmatpush1.msra.mxu0 0.0
    %552 = vmatprep.subr.mxu0 0.0
    %553 = vmatpush1.msra.mxu0 0.0
    %554 = vmatprep.subr.mxu0 0.0
    %555 = vmatpush1.msra.mxu0 0.0
    %556 = vmatprep.subr.mxu0 0.0
    %557 = vmatpush1.msra.mxu0 0.0
    %558 = vmatprep.subr.mxu0 0.0
    %559 = vmatpush1.msra.mxu0 0.0
    %560 = vmatprep.subr.mxu0 0.0
    %561 = vmatpush1.msra.mxu0 0.0
    %562 = vmatprep.subr.mxu0 0.0
    %563 = vmatpush1.msra.mxu0 0.0
    %564 = vmatprep.subr.mxu0 0.0
    %565 = vmatpush1.msra.mxu0 0.0
    %566 = vmatprep.subr.mxu0 0.0
    %567 = vmatpush1.msra.mxu0 0.0
    %568 = vmatprep.subr.mxu0 0.0
    %569 = vmatpush1.msra.mxu0 0.0
    %570 = vmatprep.subr.mxu0 0.0
    %571 = vmatpush1.msra.mxu0 0.0
    %572 = vmatprep.subr.mxu0 0.0
    %573 = vmatpush1.msra.mxu0 0.0
    %574 = vmatprep.subr.mxu0 0.0
    %575 = vmatpush1.msra.mxu0 0.0
    %576 = vmatprep.subr.mxu0 0.0
    %577 = vmatpush1.msra.mxu0 0.0
    %578 = vmatprep.subr.mxu0 0.0
    %579 = vmatpush1.msra.mxu0 0.0
    %580 = vmatprep.subr.mxu0 0.0
    %581 = vmatpush1.msra.mxu0 0.0
    %582 = vmatprep.subr.mxu0 0.0
    %583 = vmatpush1.msra.mxu0 0.0
    %584 = vmatprep.subr.mxu0 0.0
    %585 = vmatpush1.msra.mxu0 0.0
    %586 = vmatprep.subr.mxu0 0.0
    %587 = vmatpush1.msra.mxu0 0.0
    %588 = vmatprep.subr.mxu0 0.0
    %589 = vmatpush1.msra.mxu0 0.0
    %590 = vmatprep.subr.mxu0 0.0
    %591 = vmatpush1.msra.mxu0 0.0
    %592 = vmatprep.subr.mxu0 0.0
    %593 = vmatpush1.msra.mxu0 0.0
    %594 = vmatprep.mubr.f32.mxu0 0.0
    %595 = vmatmul.mubr.f32.gmra.mrb[0].mxu0 %v528
    %v596 = vpop.f32.mrb[0].mxu0
    %v597 = vadd.f32 0.0, %v596
    %v598 = vpop.f32.mrb[0].mxu0
    %599 = vdwg.mxu0
    %v600 = vrcp.pop %v430
    %v601 = vrcp.pop %v433
    %v602 = vmul.f32 %v519, %v600
    %v603 = vmul.f32 %v597, %v601
    %v604 = vld [vmem:[%s4] sm:$0xff]
    %v605 = vld [vmem:[%s4 + $0x8] sm:$0xff]
    %v606 = vld [vmem:[%s4 + $0x10] sm:$0xff]
    %v607 = vld [vmem:[%s4 + $0x18] sm:$0xff]
    %v608 = vlaneseq
    %v609 = vshrl.u32 %v608, 7
    %v610 = vsub.s32 0, %v609
    %v611 = vrot.slane %v64, %v610
    %v613 = vsel %vm77, %v602, 0
    %v616 = vsel %vm77, %v603, 0
    %618 = vmatprep.subr.mxu0 0.0
    %619 = vmatpush1.msra.mxu0 %v604
    %620 = vmatprep.subr.mxu0 0.0
    %621 = vmatpush1.msra.mxu0 %v605
    %622 = vmatprep.subr.mxu0 0.0
    %623 = vmatpush1.msra.mxu0 %v606
    %624 = vmatprep.subr.mxu0 0.0
    %625 = vmatpush1.msra.mxu0 %v607
    %626 = vmatprep.subr.mxu0 0.0
    %627 = vmatpush1.msra.mxu0 0.0
    %628 = vmatprep.subr.mxu0 0.0
    %629 = vmatpush1.msra.mxu0 0.0
    %630 = vmatprep.subr.mxu0 0.0
    %631 = vmatpush1.msra.mxu0 0.0
    %632 = vmatprep.subr.mxu0 0.0
    %633 = vmatpush1.msra.mxu0 0.0
    %634 = vmatprep.subr.mxu0 0.0
    %635 = vmatpush1.msra.mxu0 0.0
    %636 = vmatprep.subr.mxu0 0.0
    %637 = vmatpush1.msra.mxu0 0.0
    %638 = vmatprep.subr.mxu0 0.0
    %639 = vmatpush1.msra.mxu0 0.0
    %640 = vmatprep.subr.mxu0 0.0
    %641 = vmatpush1.msra.mxu0 0.0
    %642 = vmatprep.subr.mxu0 0.0
    %643 = vmatpush1.msra.mxu0 0.0
    %644 = vmatprep.subr.mxu0 0.0
    %645 = vmatpush1.msra.mxu0 0.0
    %646 = vmatprep.subr.mxu0 0.0
    %647 = vmatpush1.msra.mxu0 0.0
    %648 = vmatprep.subr.mxu0 0.0
    %649 = vmatpush1.msra.mxu0 0.0
    %650 = vmatprep.subr.mxu0 0.0
    %651 = vmatpush1.msra.mxu0 0.0
    %652 = vmatprep.subr.mxu0 0.0
    %653 = vmatpush1.msra.mxu0 0.0
    %654 = vmatprep.subr.mxu0 0.0
    %655 = vmatpush1.msra.mxu0 0.0
    %656 = vmatprep.subr.mxu0 0.0
    %657 = vmatpush1.msra.mxu0 0.0
    %658 = vmatprep.subr.mxu0 0.0
    %659 = vmatpush1.msra.mxu0 0.0
    %660 = vmatprep.subr.mxu0 0.0
    %661 = vmatpush1.msra.mxu0 0.0
    %662 = vmatprep.subr.mxu0 0.0
    %663 = vmatpush1.msra.mxu0 0.0
    %664 = vmatprep.subr.mxu0 0.0
    %665 = vmatpush1.msra.mxu0 0.0
    %666 = vmatprep.subr.mxu0 0.0
    %667 = vmatpush1.msra.mxu0 0.0
    %668 = vmatprep.subr.mxu0 0.0
    %669 = vmatpush1.msra.mxu0 0.0
    %670 = vmatprep.subr.mxu0 0.0
    %671 = vmatpush1.msra.mxu0 0.0
    %672 = vmatprep.subr.mxu0 0.0
    %673 = vmatpush1.msra.mxu0 0.0
    %674 = vmatprep.subr.mxu0 0.0
    %675 = vmatpush1.msra.mxu0 0.0
    %676 = vmatprep.subr.mxu0 0.0
    %677 = vmatpush1.msra.mxu0 0.0
    %678 = vmatprep.subr.mxu0 0.0
    %679 = vmatpush1.msra.mxu0 0.0
    %680 = vmatprep.subr.mxu0 0.0
    %681 = vmatpush1.msra.mxu0 0.0
    %682 = vmatprep.mubr.f32.mxu0 0.0
    %683 = vmatmul.mubr.f32.gmra.mrb[0].mxu0 %v613
    %v684 = vpop.f32.mrb[0].mxu0
    %v685 = vadd.f32 %v611, %v684
    %v686 = vpop.f32.mrb[0].mxu0
    %687 = vmatprep.mubr.f32.mxu0 0.0
    %688 = vmatmul.mubr.f32.gmra.mrb[0].mxu0 %v616
    %v689 = vpop.f32.mrb[0].mxu0
    %v690 = vadd.f32 %v611, %v689
    %v691 = vpop.f32.mrb[0].mxu0
    %692 = vdwg.mxu0
    %v693 = vadd.f32 %v602, %v685
    %v694 = vadd.f32 %v603, %v690
    %v695 = vlaneseq
    %v696 = vshrl.u32 %v695, 7
    %v697 = vsub.s32 0, %v696
    %v698 = vrot.slane %v67, %v697
    %v699 = vmul.f32 %v693, %v698
    %v700 = vmul.f32 %v694, %v698
    %v701 = vlaneseq
    %v702 = vshrl.u32 %v701, 7
    %v703 = vsub.s32 0, %v702
    %v704 = vrot.slane %v68, %v703
    %v705 = vadd.f32 %v699, %v704
    %v706 = vadd.f32 %v700, %v704
    %v707 = vld [vmem:[%s5] sm:$0xff]
    %v708 = vld [vmem:[%s5 + $0x8] sm:$0xff]
    %v709 = vld [vmem:[%s5 + $0x10] sm:$0xff]
    %v710 = vld [vmem:[%s5 + $0x18] sm:$0xff]
    %v711 = vlaneseq
    %v712 = vshrl.u32 %v711, 7
    %v713 = vsub.s32 0, %v712
    %v714 = vrot.slane %v65, %v713
    %v716 = vsel %vm77, %v705, 0
    %v719 = vsel %vm77, %v706, 0
    %721 = vmatprep.subr.mxu0 0.0
    %722 = vmatpush1.msra.mxu0 %v707
    %723 = vmatprep.subr.mxu0 0.0
    %724 = vmatpush1.msra.mxu0 %v708
    %725 = vmatprep.subr.mxu0 0.0
    %726 = vmatpush1.msra.mxu0 %v709
    %727 = vmatprep.subr.mxu0 0.0
    %728 = vmatpush1.msra.mxu0 %v710
    %729 = vmatprep.subr.mxu0 0.0
    %730 = vmatpush1.msra.mxu0 0.0
    %731 = vmatprep.subr.mxu0 0.0
    %732 = vmatpush1.msra.mxu0 0.0
    %733 = vmatprep.subr.mxu0 0.0
    %734 = vmatpush1.msra.mxu0 0.0
    %735 = vmatprep.subr.mxu0 0.0
    %736 = vmatpush1.msra.mxu0 0.0
    %737 = vmatprep.subr.mxu0 0.0
    %738 = vmatpush1.msra.mxu0 0.0
    %739 = vmatprep.subr.mxu0 0.0
    %740 = vmatpush1.msra.mxu0 0.0
    %741 = vmatprep.subr.mxu0 0.0
    %742 = vmatpush1.msra.mxu0 0.0
    %743 = vmatprep.subr.mxu0 0.0
    %744 = vmatpush1.msra.mxu0 0.0
    %745 = vmatprep.subr.mxu0 0.0
    %746 = vmatpush1.msra.mxu0 0.0
    %747 = vmatprep.subr.mxu0 0.0
    %748 = vmatpush1.msra.mxu0 0.0
    %749 = vmatprep.subr.mxu0 0.0
    %750 = vmatpush1.msra.mxu0 0.0
    %751 = vmatprep.subr.mxu0 0.0
    %752 = vmatpush1.msra.mxu0 0.0
    %753 = vmatprep.subr.mxu0 0.0
    %754 = vmatpush1.msra.mxu0 0.0
    %755 = vmatprep.subr.mxu0 0.0
    %756 = vmatpush1.msra.mxu0 0.0
    %757 = vmatprep.subr.mxu0 0.0
    %758 = vmatpush1.msra.mxu0 0.0
    %759 = vmatprep.subr.mxu0 0.0
    %760 = vmatpush1.msra.mxu0 0.0
    %761 = vmatprep.subr.mxu0 0.0
    %762 = vmatpush1.msra.mxu0 0.0
    %763 = vmatprep.subr.mxu0 0.0
    %764 = vmatpush1.msra.mxu0 0.0
    %765 = vmatprep.subr.mxu0 0.0
    %766 = vmatpush1.msra.mxu0 0.0
    %767 = vmatprep.subr.mxu0 0.0
    %768 = vmatpush1.msra.mxu0 0.0
    %769 = vmatprep.subr.mxu0 0.0
    %770 = vmatpush1.msra.mxu0 0.0
    %771 = vmatprep.subr.mxu0 0.0
    %772 = vmatpush1.msra.mxu0 0.0
    %773 = vmatprep.subr.mxu0 0.0
    %774 = vmatpush1.msra.mxu0 0.0
    %775 = vmatprep.subr.mxu0 0.0
    %776 = vmatpush1.msra.mxu0 0.0
    %777 = vmatprep.subr.mxu0 0.0
    %778 = vmatpush1.msra.mxu0 0.0
    %779 = vmatprep.subr.mxu0 0.0
    %780 = vmatpush1.msra.mxu0 0.0
    %781 = vmatprep.subr.mxu0 0.0
    %782 = vmatpush1.msra.mxu0 0.0
    %783 = vmatprep.subr.mxu0 0.0
    %784 = vmatpush1.msra.mxu0 0.0
    %785 = vmatprep.mubr.f32.mxu0 0.0
    %786 = vmatmul.mubr.f32.gmra.mrb[0].mxu0 %v716
    %v787 = vpop.f32.mrb[0].mxu0
    %v788 = vadd.f32 %v714, %v787
    %v789 = vpop.f32.mrb[0].mxu0
    %790 = vmatprep.mubr.f32.mxu0 0.0
    %791 = vmatmul.mubr.f32.gmra.mrb[0].mxu0 %v719
    %v792 = vpop.f32.mrb[0].mxu0
    %v793 = vadd.f32 %v714, %v792
    %v794 = vpop.f32.mrb[0].mxu0
    %795 = vdwg.mxu0
    %v796 = vmax.f32 %v788, 0.0
    %v797 = vmax.f32 %v793, 0.0
    %v798 = vld [vmem:[%s6] sm:$0xff]
    %v799 = vld [vmem:[%s6 + $0x8] sm:$0xff]
    %v800 = vld [vmem:[%s6 + $0x10] sm:$0xff]
    %v801 = vld [vmem:[%s6 + $0x18] sm:$0xff]
    %v802 = vld [vmem:[%s6 + $0x20] sm:$0xff]
    %v803 = vld [vmem:[%s6 + $0x28] sm:$0xff]
    %v804 = vld [vmem:[%s6 + $0x30] sm:$0xff]
    %v805 = vld [vmem:[%s6 + $0x38] sm:$0xff]
    %v806 = vlaneseq
    %v807 = vshrl.u32 %v806, 7
    %v808 = vsub.s32 0, %v807
    %v809 = vrot.slane %v66, %v808
    %vm810 = vcmask 523264
    %v812 = vsel %vm810, %v796, 0
    %v815 = vsel %vm810, %v797, 0
    %817 = vmatprep.subr.mxu0 0.0
    %818 = vmatpush1.msra.mxu0 %v798
    %819 = vmatprep.subr.mxu0 0.0
    %820 = vmatpush1.msra.mxu0 %v799
    %821 = vmatprep.subr.mxu0 0.0
    %822 = vmatpush1.msra.mxu0 %v800
    %823 = vmatprep.subr.mxu0 0.0
    %824 = vmatpush1.msra.mxu0 %v801
    %825 = vmatprep.subr.mxu0 0.0
    %826 = vmatpush1.msra.mxu0 %v802
    %827 = vmatprep.subr.mxu0 0.0
    %828 = vmatpush1.msra.mxu0 %v803
    %829 = vmatprep.subr.mxu0 0.0
    %830 = vmatpush1.msra.mxu0 %v804
    %831 = vmatprep.subr.mxu0 0.0
    %832 = vmatpush1.msra.mxu0 %v805
    %833 = vmatprep.subr.mxu0 0.0
    %834 = vmatpush1.msra.mxu0 0.0
    %835 = vmatprep.subr.mxu0 0.0
    %836 = vmatpush1.msra.mxu0 0.0
    %837 = vmatprep.subr.mxu0 0.0
    %838 = vmatpush1.msra.mxu0 0.0
    %839 = vmatprep.subr.mxu0 0.0
    %840 = vmatpush1.msra.mxu0 0.0
    %841 = vmatprep.subr.mxu0 0.0
    %842 = vmatpush1.msra.mxu0 0.0
    %843 = vmatprep.subr.mxu0 0.0
    %844 = vmatpush1.msra.mxu0 0.0
    %845 = vmatprep.subr.mxu0 0.0
    %846 = vmatpush1.msra.mxu0 0.0
    %847 = vmatprep.subr.mxu0 0.0
    %848 = vmatpush1.msra.mxu0 0.0
    %849 = vmatprep.subr.mxu0 0.0
    %850 = vmatpush1.msra.mxu0 0.0
    %851 = vmatprep.subr.mxu0 0.0
    %852 = vmatpush1.msra.mxu0 0.0
    %853 = vmatprep.subr.mxu0 0.0
    %854 = vmatpush1.msra.mxu0 0.0
    %855 = vmatprep.subr.mxu0 0.0
    %856 = vmatpush1.msra.mxu0 0.0
    %857 = vmatprep.subr.mxu0 0.0
    %858 = vmatpush1.msra.mxu0 0.0
    %859 = vmatprep.subr.mxu0 0.0
    %860 = vmatpush1.msra.mxu0 0.0
    %861 = vmatprep.subr.mxu0 0.0
    %862 = vmatpush1.msra.mxu0 0.0
    %863 = vmatprep.subr.mxu0 0.0
    %864 = vmatpush1.msra.mxu0 0.0
    %865 = vmatprep.subr.mxu0 0.0
    %866 = vmatpush1.msra.mxu0 0.0
    %867 = vmatprep.subr.mxu0 0.0
    %868 = vmatpush1.msra.mxu0 0.0
    %869 = vmatprep.subr.mxu0 0.0
    %870 = vmatpush1.msra.mxu0 0.0
    %871 = vmatprep.subr.mxu0 0.0
    %872 = vmatpush1.msra.mxu0 0.0
    %873 = vmatprep.subr.mxu0 0.0
    %874 = vmatpush1.msra.mxu0 0.0
    %875 = vmatprep.subr.mxu0 0.0
    %876 = vmatpush1.msra.mxu0 0.0
    %877 = vmatprep.subr.mxu0 0.0
    %878 = vmatpush1.msra.mxu0 0.0
    %879 = vmatprep.subr.mxu0 0.0
    %880 = vmatpush1.msra.mxu0 0.0
    %881 = vmatprep.mubr.f32.mxu0 0.0
    %882 = vmatmul.mubr.f32.gmra.mrb[0].mxu0 %v812
    %v883 = vpop.f32.mrb[0].mxu0
    %v884 = vadd.f32 %v809, %v883
    %v885 = vpop.f32.mrb[0].mxu0
    %886 = vmatprep.mubr.f32.mxu0 0.0
    %887 = vmatmul.mubr.f32.gmra.mrb[0].mxu0 %v815
    %v888 = vpop.f32.mrb[0].mxu0
    %v889 = vadd.f32 %v809, %v888
    %v890 = vpop.f32.mrb[0].mxu0
    %891 = vdwg.mxu0
    %v892 = vadd.f32 %v705, %v884
    %v893 = vadd.f32 %v706, %v889
    %v894 = vmul.f32 %v892, %v698
    %v895 = vmul.f32 %v893, %v698
    %v896 = vadd.f32 %v894, %v704
    %v897 = vadd.f32 %v895, %v704
    %898 = vst.msk [vmem:[#allocation7] sm:$0xff] %vm77, %v896
    %899 = vst.msk [vmem:[#allocation7 + $0x8] sm:$0xff] %vm77, %v897
    // Predicated region
    $region42: #{tpu_custom_call.1} parent=1 // pred_check
      _
    $region43: #{tpu_custom_call.1} parent=1 // pred_check_branch
      %901 = sbr.rel (0) target = $region45
    $region44: #{tpu_custom_call.1} parent=1 // pred_region
      %s903 = ssub.s32 256, 256
      %904 = vsyncadd [#allocation4], %s903
      %s905 = sshll.u32 [#allocation7], 4
      %s906 = int_to_ptr.vmem [resolvable:$true] %s905
      %911 = dma.vmem_to_hbm [thread:$0]  %s906, 256, %s8, [#allocation4], 128, 128, 8
    $region45: #{tpu_custom_call.1} parent=1 // pred_fallthru
      _
    // Predicated region
    $region46: #{tpu_custom_call.1} parent=1 // pred_check
      _
    $region47: #{tpu_custom_call.1} parent=1 // pred_check_branch
      %913 = sbr.rel (0) target = $region49
    $region48: #{tpu_custom_call.1} parent=1 // pred_region
      %914 = dma.done [#allocation4], 256
    $region49: #{tpu_custom_call.1} parent=1 // pred_fallthru
      _
    %915 = vsyncpa [#allocation3], 1
    %916 = vsyncpa [#allocation6], 1
    %917 = vsyncpa [#allocation4], 1

</llo_original>
